<compile_context>
chip_gen: v5e
topology: v5e:2x2
jax: 0.10.0
libtpu: 0.0.40
codegen_flags: <defaults>
</compile_context>

<pallas_src>
import jax
import jax.numpy as jnp
from jax.experimental import pallas as pl
from jax.experimental.pallas import tpu as pltpu


def _round_up(a: int, b: int) -> int:
    return (a + b - 1) // b * b


def _tpu_config():
    """Generation-aware tiling / VMEM defaults (safe fallback if unknown)."""
    kind = ""
    try:
        kind = jax.devices()[0].device_kind.lower()
    except Exception:
        pass
    if "v7" in kind or "tpu7" in kind:
        cap = 48 << 20   # 64 MiB physical per TC -> leave compiler headroom
        return dict(tm=512, gran=256, vmem_cap=cap, vmem_budget=cap - (8 << 20), cores=2)
    if "v6" in kind:
        cap = 96 << 20   # 128 MiB physical
        return dict(tm=1024, gran=256, vmem_cap=cap, vmem_budget=cap - (8 << 20), cores=1)
    if "v5 lite" in kind or "v5e" in kind or "v5litepod" in kind:
        cap = 96 << 20   # 128 MiB physical, default scoped limit is only 16 MiB
        return dict(tm=384, gran=128, vmem_cap=cap, vmem_budget=cap - (8 << 20), cores=1)
    cap = 48 << 20       # conservative: valid on every generation
    return dict(tm=512, gran=128, vmem_cap=cap, vmem_budget=cap - (8 << 20), cores=1)


# ---------------------------------------------------------------------------
# Kernels
# ---------------------------------------------------------------------------

def _pwff_kernel_single(x_ref, w1_ref, b1_ref, w2_ref, b2_ref, o_ref):
    """Weights fully resident (single k step): one pass, no accumulator."""
    h = jnp.dot(x_ref[...], w1_ref[...], preferred_element_type=jnp.float32)
    h = jnp.maximum(h + b1_ref[...], 0.0)
    out = jnp.dot(h.astype(w2_ref.dtype), w2_ref[...],
                  preferred_element_type=jnp.float32)
    o_ref[...] = (out + b2_ref[...]).astype(o_ref.dtype)


def _pwff_kernel_accout(x_ref, w1_ref, b1_ref, w2_ref, b2_ref, o_ref):
    """Chunked D_ff, f32 output: accumulate directly into the resident output block."""
    k = pl.program_id(1)

    @pl.when(k == 0)
    def _():
        o_ref[...] = jnp.zeros_like(o_ref)

    h = jnp.dot(x_ref[...], w1_ref[...], preferred_element_type=jnp.float32)
    h = jnp.maximum(h + b1_ref[...], 0.0)
    o_ref[...] += jnp.dot(h.astype(w2_ref.dtype), w2_ref[...],
                          preferred_element_type=jnp.float32)

    @pl.when(k == pl.num_programs(1) - 1)
    def _():
        o_ref[...] += b2_ref[...]


def _pwff_kernel_scratch(x_ref, w1_ref, b1_ref, w2_ref, b2_ref, o_ref, acc_ref):
    """Chunked D_ff, non-f32 output: f32 VMEM accumulator, store once at the end."""
    k = pl.program_id(1)

    @pl.when(k == 0)
    def _():
        acc_ref[...] = jnp.zeros_like(acc_ref)

    h = jnp.dot(x_ref[...], w1_ref[...], preferred_element_type=jnp.float32)
    h = jnp.maximum(h + b1_ref[...], 0.0)
    acc_ref[...] += jnp.dot(h.astype(w2_ref.dtype), w2_ref[...],
                            preferred_element_type=jnp.float32)

    @pl.when(k == pl.num_programs(1) - 1)
    def _():
        o_ref[...] = (acc_ref[...] + b2_ref[...]).astype(o_ref.dtype)


# ---------------------------------------------------------------------------
# Wrapper
# ---------------------------------------------------------------------------

def _prep(a, dtype, pads):
    """Cast / pad only when actually needed (no-op if already prepared)."""
    if a.dtype != dtype:
        a = a.astype(dtype)
    if any(p != 0 for (_, p) in pads):
        a = jnp.pad(a, pads)
    return a


def position_wise_feed_forward(Z, w1, b1, w2, b2, *, tm=None, tk=None,
                               compute_dtype=jnp.bfloat16):
    """relu(Z @ w1 + b1) @ w2 + b2.

    Z : (B, S, D). w1: (D, D_ff), b1: (D_ff,), w2: (D_ff, D), b2: (D,).
    compute_dtype: dtype fed to the MXU (default bfloat16); accumulation is f32.
    Output dtype matches Z.dtype.
    """
    B, S, D = Z.shape
    D_in, D_ff = w1.shape
    assert D_in == D and w2.shape == (D_ff, D)
    assert b1.shape == (D_ff,) and b2.shape == (D,)

    cfg = _tpu_config()
    gran = cfg["gran"]
    out_dtype = Z.dtype
    cbytes = jnp.dtype(compute_dtype).itemsize
    obytes = jnp.dtype(out_dtype).itemsize

    M = B * S
    D_pad = _round_up(D, 128)
    Dff_pad0 = _round_up(D_ff, 128)

    # ----- row tile (large to clear the weight-stream roofline) -----
    tm_ = tm if tm is not None else cfg["tm"]
    tm_ = _round_up(min(tm_, _round_up(M, 8)), 8)

    budget = cfg["vmem_budget"]

    def _fixed(t):
        # x tiles + out tiles (double-buffered) + worst-case f32 accumulator.
        return 2 * t * D_pad * cbytes + 2 * t * D_pad * obytes + t * D_pad * 4

    while _fixed(tm_) > budget // 2 and tm_ > 64:
        tm_ = _round_up(tm_ // 2, 8)

    M_pad = _round_up(M, tm_)

    # ----- D_ff chunking: prefer fully VMEM-resident weights (tk = Dff_pad) -----
    bias_bytes = 2 * 2 * (Dff_pad0 + D_pad) * 4
    if tk is not None:
        tk_ = min(_round_up(tk, 128), Dff_pad0)
        nk = pl.cdiv(Dff_pad0, tk_)
        Dff_pad = nk * tk_
    else:
        resident = 4 * D_pad * Dff_pad0 * cbytes  # W1+W2, double-buffered
        if _fixed(tm_) + resident + bias_bytes <= budget:
            tk_, nk, Dff_pad = Dff_pad0, 1, Dff_pad0
        else:
            tk_max = (budget - _fixed(tm_) - bias_bytes) // (4 * D_pad * cbytes)
            tk_max = max((tk_max // gran) * gran, gran)
            nk = pl.cdiv(Dff_pad0, tk_max)
            tk_ = _round_up(pl.cdiv(Dff_pad0, nk), gran)   # balanced chunks
            Dff_pad = nk * tk_

    # ----- v7x: keep the parallel row axis evenly divisible by the 2 cores -----
    if cfg["cores"] > 1:
        n_rows = M_pad // tm_
        if n_rows > 1 and n_rows % cfg["cores"] != 0:
            M_pad = _round_up(n_rows, cfg["cores"]) * tm_

    # ----- operand prep (no-op when already padded/cast, e.g. done at init) -----
    x = _prep(Z.reshape(M, D), compute_dtype, ((0, M_pad - M), (0, D_pad - D)))
    w1p = _prep(w1, compute_dtype, ((0, D_pad - D), (0, Dff_pad - D_ff)))
    w2p = _prep(w2, compute_dtype, ((0, Dff_pad - D_ff), (0, D_pad - D)))
    b1p = _prep(b1.reshape(1, D_ff), jnp.float32, ((0, 0), (0, Dff_pad - D_ff)))
    b2p = _prep(b2.reshape(1, D), jnp.float32, ((0, 0), (0, D_pad - D)))

    # ----- kernel selection -----
    if nk == 1:
        kernel, scratch = _pwff_kernel_single, []
    elif out_dtype == jnp.float32:
        kernel, scratch = _pwff_kernel_accout, []
    else:
        kernel = _pwff_kernel_scratch
        scratch = [pltpu.VMEM((tm_, D_pad), jnp.float32)]

    # ----- VMEM limit: generation-aware cap, sized from the actual buffers -----
    w_bytes = 4 * D_pad * tk_ * cbytes            # W1+W2 chunks, double-buffered
    vmem_est = _fixed(tm_) + w_bytes + bias_bytes
    vmem_limit = int(min(cfg["vmem_cap"], max(vmem_est + (8 << 20), 32 << 20)))

    out = pl.pallas_call(
        kernel,
        out_shape=jax.ShapeDtypeStruct((M_pad, D_pad), out_dtype),
        grid_spec=pltpu.PrefetchScalarGridSpec(
            num_scalar_prefetch=0,
            grid=(M_pad // tm_, nk),
            in_specs=[
                pl.BlockSpec((tm_, D_pad), lambda i, k: (i, 0)),   # x rows
                pl.BlockSpec((D_pad, tk_), lambda i, k: (0, k)),   # W1 chunk
                pl.BlockSpec((1, tk_), lambda i, k: (0, k)),       # b1 chunk
                pl.BlockSpec((tk_, D_pad), lambda i, k: (k, 0)),   # W2 chunk
                pl.BlockSpec((1, D_pad), lambda i, k: (0, 0)),     # b2
            ],
            out_specs=pl.BlockSpec((tm_, D_pad), lambda i, k: (i, 0)),
            scratch_shapes=scratch,
        ),
        compiler_params=pltpu.CompilerParams(
            dimension_semantics=("parallel", "arbitrary"),
            vmem_limit_bytes=vmem_limit,
        ),
    )(x, w1p, b1p, w2p, b2p)

    return out[:M, :D].reshape(B, S, D)


# ---------------------------------------------------------------------------
# Self-test
# ---------------------------------------------------------------------------

if __name__ == "__main__":
    # Small shapes consistent with the module (D must be even).
    B, S, D, D_ff = 2, 8, 32, 64

    key = jax.random.PRNGKey(0)
    kz, kw1, kb1, kw2, kb2, kw1b, kb1b, kw2b, kb2b = jax.random.split(key, 9)

    Z = jax.random.normal(kz, (B, S, D), dtype=jnp.float32)

    # Deterministic nn.Linear-style init: U(-1/sqrt(fan_in), 1/sqrt(fan_in)),
    # stored as (in_dim, out_dim) so the kernel computes x @ W (== x @ weight.T).
    lim1 = 1.0 / (D ** 0.5)
    lim2 = 1.0 / (D_ff ** 0.5)
    w1 = jax.random.uniform(kw1, (D, D_ff), jnp.float32, -lim1, lim1)
    b1 = jax.random.uniform(kb1, (D_ff,), jnp.float32, -lim1, lim1)
    w2 = jax.random.uniform(kw2, (D_ff, D), jnp.float32, -lim2, lim2)
    b2 = jax.random.uniform(kb2, (D,), jnp.float32, -lim2, lim2)

    ref = jnp.maximum(Z @ w1 + b1, 0.0) @ w2 + b2

    # Exact f32 compute path (weights-resident single-step kernel).
    out_f32 = jax.block_until_ready(
        position_wise_feed_forward(Z, w1, b1, w2, b2, compute_dtype=jnp.float32))
    assert out_f32.shape == (B, S, D)
    assert jnp.allclose(out_f32, ref, atol=1e-5, rtol=1e-5), "f32 mismatch vs reference"

    # Default production path: bf16 MXU with f32 accumulation.
    out_bf = jax.block_until_ready(position_wise_feed_forward(Z, w1, b1, w2, b2))
    assert jnp.allclose(out_bf, ref, atol=1e-1, rtol=1e-1), "bf16 mismatch vs reference"

    # Row-padding path (batch*seq not a multiple of 8).
    Z2 = Z[:, :5, :]
    ref2 = jnp.maximum(Z2 @ w1 + b1, 0.0) @ w2 + b2
    out2 = jax.block_until_ready(
        position_wise_feed_forward(Z2, w1, b1, w2, b2, compute_dtype=jnp.float32))
    assert jnp.allclose(out2, ref2, atol=1e-5, rtol=1e-5), "padded-rows mismatch"

    # Chunked D_ff path (forced tk) to exercise the accumulating kernels.
    D_ff2 = 256
    lim1b = 1.0 / (D ** 0.5)
    lim2b = 1.0 / (D_ff2 ** 0.5)
    w1b = jax.random.uniform(kw1b, (D, D_ff2), jnp.float32, -lim1b, lim1b)
    b1b = jax.random.uniform(kb1b, (D_ff2,), jnp.float32, -lim1b, lim1b)
    w2b = jax.random.uniform(kw2b, (D_ff2, D), jnp.float32, -lim2b, lim2b)
    b2b = jax.random.uniform(kb2b, (D,), jnp.float32, -lim2b, lim2b)
    ref3 = jnp.maximum(Z @ w1b + b1b, 0.0) @ w2b + b2b

    # f32 output -> accumulate-into-output kernel.
    out3 = jax.block_until_ready(
        position_wise_feed_forward(Z, w1b, b1b, w2b, b2b,
                                   tk=128, compute_dtype=jnp.float32))
    assert jnp.allclose(out3, ref3, atol=1e-5, rtol=1e-5), "chunked f32 mismatch"

    # bf16 input/output -> f32 scratch-accumulator kernel.
    out4 = jax.block_until_ready(
        position_wise_feed_forward(Z.astype(jnp.bfloat16), w1b, b1b, w2b, b2b,
                                   tk=128))
    assert out4.dtype == jnp.bfloat16
    assert jnp.allclose(out4.astype(jnp.float32), ref3, atol=1e-1, rtol=1e-1), \
        "chunked bf16 mismatch"

    print("KERNEL_OK")
</pallas_src>

<mosaic_0001>
module attributes {stable_mosaic.version = 11 : i64} {
  func.func @_pwff_kernel_single(%arg0: i32, %arg1: i32, %arg2: memref<16x128xf32, #tpu.memory_space<vmem>>, %arg3: memref<128x128xf32, #tpu.memory_space<vmem>>, %arg4: memref<1x128xf32, #tpu.memory_space<vmem>>, %arg5: memref<128x128xf32, #tpu.memory_space<vmem>>, %arg6: memref<1x128xf32, #tpu.memory_space<vmem>>, %arg7: memref<16x128xf32, #tpu.memory_space<vmem>>) attributes {dimension_semantics = [#tpu.dimension_semantics<parallel>, #tpu.dimension_semantics<arbitrary>], iteration_bounds = array<i64: 1, 1>, scalar_prefetch = 0 : i64, scratch_operands = 0 : i64, tpu.core_type = #tpu.core_type<tc>, window_params = [{transform_indices = @transform_0, window_bounds = array<i64: 16, 128>}, {transform_indices = @transform_1, window_bounds = array<i64: 128, 128>}, {transform_indices = @transform_2, window_bounds = array<i64: 1, 128>}, {transform_indices = @transform_3, window_bounds = array<i64: 128, 128>}, {pipeline_mode = #tpu.pipeline_mode<synchronous>, transform_indices = @transform_4, window_bounds = array<i64: 1, 128>}, {transform_indices = @transform_5, window_bounds = array<i64: 16, 128>}]} {
    %c0 = arith.constant 0 : index
    %c0_0 = arith.constant 0 : index
    %0 = vector.load %arg2[%c0, %c0_0] : memref<16x128xf32, #tpu.memory_space<vmem>>, vector<16x128xf32>
    %c0_1 = arith.constant 0 : index
    %c0_2 = arith.constant 0 : index
    %1 = vector.load %arg3[%c0_1, %c0_2] : memref<128x128xf32, #tpu.memory_space<vmem>>, vector<128x128xf32>
    %cst = arith.constant dense<0.000000e+00> : vector<16x128xf32>
    %2 = tpu.matmul %0, %1, %cst {dimension_numbers = #tpu.dot_dimension_numbers<[1], [0], [0], [1], [0, 0, 1, 1], [], []>} : vector<16x128xf32>, vector<128x128xf32>, vector<16x128xf32> -> vector<16x128xf32>
    %c0_3 = arith.constant 0 : index
    %c0_4 = arith.constant 0 : index
    %3 = vector.load %arg4[%c0_3, %c0_4] : memref<1x128xf32, #tpu.memory_space<vmem>>, vector<1x128xf32>
    %4 = vector.broadcast %3 : vector<1x128xf32> to vector<16x128xf32>
    %5 = arith.addf %2, %4 : vector<16x128xf32>
    %cst_5 = arith.constant 0.000000e+00 : f32
    %6 = vector.broadcast %cst_5 : f32 to vector<16x128xf32>
    %7 = arith.maximumf %5, %6 : vector<16x128xf32>
    %c0_6 = arith.constant 0 : index
    %c0_7 = arith.constant 0 : index
    %8 = vector.load %arg5[%c0_6, %c0_7] : memref<128x128xf32, #tpu.memory_space<vmem>>, vector<128x128xf32>
    %cst_8 = arith.constant dense<0.000000e+00> : vector<16x128xf32>
    %9 = tpu.matmul %7, %8, %cst_8 {dimension_numbers = #tpu.dot_dimension_numbers<[1], [0], [0], [1], [0, 0, 1, 1], [], []>} : vector<16x128xf32>, vector<128x128xf32>, vector<16x128xf32> -> vector<16x128xf32>
    %c0_9 = arith.constant 0 : index
    %c0_10 = arith.constant 0 : index
    %10 = vector.load %arg6[%c0_9, %c0_10] : memref<1x128xf32, #tpu.memory_space<vmem>>, vector<1x128xf32>
    %11 = vector.broadcast %10 : vector<1x128xf32> to vector<16x128xf32>
    %12 = arith.addf %9, %11 : vector<16x128xf32>
    %c0_11 = arith.constant 0 : index
    %c0_12 = arith.constant 0 : index
    %13 = vector.load %arg7[%c0_11, %c0_12] : memref<16x128xf32, #tpu.memory_space<vmem>>, vector<16x128xf32>
    tpu.vector_store %arg7[%c0_11, %c0_12], %12 {strides = array<i32>} : memref<16x128xf32, #tpu.memory_space<vmem>>, vector<16x128xf32>,
    return
  }
  func.func @transform_0(%arg0: i32, %arg1: i32) -> (i32, i32) {
    %c0_i32 = arith.constant 0 : i32
    %c0_i32_0 = arith.constant 0 : i32
    return %arg0, %c0_i32 : i32, i32
  }
  func.func @transform_1(%arg0: i32, %arg1: i32) -> (i32, i32) {
    %c0_i32 = arith.constant 0 : i32
    %c0_i32_0 = arith.constant 0 : i32
    return %c0_i32, %arg1 : i32, i32
  }
  func.func @transform_2(%arg0: i32, %arg1: i32) -> (i32, i32) {
    %c0_i32 = arith.constant 0 : i32
    %c0_i32_0 = arith.constant 0 : i32
    return %c0_i32, %arg1 : i32, i32
  }
  func.func @transform_3(%arg0: i32, %arg1: i32) -> (i32, i32) {
    %c0_i32 = arith.constant 0 : i32
    %c0_i32_0 = arith.constant 0 : i32
    return %arg1, %c0_i32 : i32, i32
  }
  func.func @transform_4(%arg0: i32, %arg1: i32) -> (i32, i32) {
    %c0_i32 = arith.constant 0 : i32
    %c0_i32_0 = arith.constant 0 : i32
    %c0_i32_1 = arith.constant 0 : i32
    return %c0_i32, %c0_i32_0 : i32, i32
  }
  func.func @transform_5(%arg0: i32, %arg1: i32) -> (i32, i32) {
    %c0_i32 = arith.constant 0 : i32
    %c0_i32_0 = arith.constant 0 : i32
    return %arg0, %c0_i32 : i32, i32
  }
}

</mosaic_0001>

<llo_original>
// kernel: tpu_custom_call.1
$region0: #{tpu_custom_call.1}
  #allocation0 [shape = 'u32[]', space=smem, size = 0x4, offset = 0x4, fixed_abs, tag = 'smem constant byte address 0x4 - core index']
  #allocation1 [shape = 'u32[72,128]{1,0:T(1,128)}', space=vmem, size = 0x9000, scoped, tag = 'internal scratch']
  %s0 = inlined_call_operand.hbm [shape: f32[16,128], index: 0, kind: input, shape index: {}]
  %s1 = inlined_call_operand.hbm [shape: f32[128,128], index: 1, kind: input, shape index: {}]
  %s2 = inlined_call_operand.vmem [shape: f32[1,128], index: 2, kind: input, shape index: {}]
  %s3 = inlined_call_operand.hbm [shape: f32[128,128], index: 3, kind: input, shape index: {}]
  %s4 = inlined_call_operand.vmem [shape: f32[1,128], index: 4, kind: input, shape index: {}]
  %s5 = inlined_call_operand.hbm [shape: f32[16,128], index: 5, kind: output, shape index: {}]
  %s6 = sld [smem:[#allocation0]]
  $region42: #{tpu_custom_call.1} parent=0
    _
  %s8 = ssub.s32 1, %s6
  %s9 = scalar_select 0, %s8, %s6
  $region1: #{tpu_custom_call.1} parent=0
    #allocation2 [shape = 'u8[8192]{0}', space=vmem, size = 0x2000, scoped, tag = 'input window, operand 0, single buffered']
    #allocation3 [shape = 's32[1]{0}', space=sflag, size = 0x4, scoped, tag = 'scoped memory for tpu_custom_call.1']
    #allocation4 [shape = 's32[1]{0}', space=sflag, size = 0x4, scoped, tag = 'scoped memory for tpu_custom_call.1']
    #allocation5 [shape = 'u8[65536]{0}', space=vmem, size = 0x10000, scoped, tag = 'input window, operand 1, single buffered']
    #allocation6 [shape = 's32[1]{0}', space=sflag, size = 0x4, scoped, tag = 'scoped memory for tpu_custom_call.1']
    #allocation7 [shape = 'u8[65536]{0}', space=vmem, size = 0x10000, scoped, tag = 'input window, operand 3, single buffered']
    #allocation8 [shape = 'u8[8192]{0}', space=vmem, size = 0x2000, scoped, tag = 'output window, operand 0, single buffered']
    %10 = vsyncpa [#allocation3], 0
    %11 = vsyncpa [#allocation6], 0
    %12 = vsyncpa [#allocation4], 0
    // Predicated region
    $region2: #{tpu_custom_call.1} parent=1 // pred_check
      _
    $region3: #{tpu_custom_call.1} parent=1 // pred_check_branch
      %14 = sbr.rel (0) target = $region5
    $region4: #{tpu_custom_call.1} parent=1 // pred_region
      %16 = vsyncadd [#allocation3], 0
      %s17 = sshll.u32 %s0, 4
      %s18 = int_to_ptr.hbm [resolvable:$true] %s17
      %s19 = sshll.u32 [#allocation2], 4
      %s20 = int_to_ptr.vmem [resolvable:$true] %s19
      %25 = dma.hbm_to_vmem [thread:$0]  %s18, 256, %s20, [#allocation3], 128, 128, 8
    $region5: #{tpu_custom_call.1} parent=1 // pred_fallthru
      _
    // Predicated region
    $region6: #{tpu_custom_call.1} parent=1 // pred_check
      _
    $region7: #{tpu_custom_call.1} parent=1 // pred_check_branch
      %27 = sbr.rel (0) target = $region9
    $region8: #{tpu_custom_call.1} parent=1 // pred_region
      %29 = vsyncadd [#allocation6], 0
      %s30 = sshll.u32 %s1, 4
      %s31 = int_to_ptr.hbm [resolvable:$true] %s30
      %s32 = sshll.u32 [#allocation5], 4
      %s33 = int_to_ptr.vmem [resolvable:$true] %s32
      %38 = dma.hbm_to_vmem [thread:$0]  %s31, 2048, %s33, [#allocation6], 128, 128, 8
    $region9: #{tpu_custom_call.1} parent=1 // pred_fallthru
      _
    // Predicated region
    $region10: #{tpu_custom_call.1} parent=1 // pred_check
      _
    $region11: #{tpu_custom_call.1} parent=1 // pred_check_branch
      %40 = sbr.rel (0) target = $region13
    $region12: #{tpu_custom_call.1} parent=1 // pred_region
      _
    $region13: #{tpu_custom_call.1} parent=1 // pred_fallthru
      _
    // Predicated region
    $region14: #{tpu_custom_call.1} parent=1 // pred_check
      _
    $region15: #{tpu_custom_call.1} parent=1 // pred_check_branch
      %42 = sbr.rel (0) target = $region17
    $region16: #{tpu_custom_call.1} parent=1 // pred_region
      %44 = vsyncadd [#allocation6], 0
      %s45 = sshll.u32 %s3, 4
      %s46 = int_to_ptr.hbm [resolvable:$true] %s45
      %s47 = sshll.u32 [#allocation7], 4
      %s48 = int_to_ptr.vmem [resolvable:$true] %s47
      %53 = dma.hbm_to_vmem [thread:$0]  %s46, 2048, %s48, [#allocation6], 128, 128, 8
    $region17: #{tpu_custom_call.1} parent=1 // pred_fallthru
      _
    // Predicated region
    $region18: #{tpu_custom_call.1} parent=1 // pred_check
      _
    $region19: #{tpu_custom_call.1} parent=1 // pred_check_branch
      %55 = sbr.rel (0) target = $region21
    $region20: #{tpu_custom_call.1} parent=1 // pred_region
      _
    $region21: #{tpu_custom_call.1} parent=1 // pred_fallthru
      _
    // Predicated region
    $region22: #{tpu_custom_call.1} parent=1 // pred_check
      _
    $region23: #{tpu_custom_call.1} parent=1 // pred_check_branch
      %57 = sbr.rel (0) target = $region25
    $region24: #{tpu_custom_call.1} parent=1 // pred_region
      %59 = dma.done [#allocation3], 256
    $region25: #{tpu_custom_call.1} parent=1 // pred_fallthru
      _
    // Predicated region
    $region26: #{tpu_custom_call.1} parent=1 // pred_check
      _
    $region27: #{tpu_custom_call.1} parent=1 // pred_check_branch
      %61 = sbr.rel (0) target = $region29
    $region28: #{tpu_custom_call.1} parent=1 // pred_region
      %63 = dma.done [#allocation6], 2048
    $region29: #{tpu_custom_call.1} parent=1 // pred_fallthru
      _
    // Predicated region
    $region30: #{tpu_custom_call.1} parent=1 // pred_check
      _
    $region31: #{tpu_custom_call.1} parent=1 // pred_check_branch
      %65 = sbr.rel (0) target = $region33
    $region32: #{tpu_custom_call.1} parent=1 // pred_region
      %67 = dma.done [#allocation6], 2048
    $region33: #{tpu_custom_call.1} parent=1 // pred_fallthru
      _
    %v68 = vld [vmem:[#allocation2] sm:$0xff]
    %v69 = vld [vmem:[#allocation2 + $0x8] sm:$0xff]
    %v70 = vld [vmem:[#allocation5] sm:$0xff]
    %v71 = vld [vmem:[#allocation5 + $0x8] sm:$0xff]
    %v72 = vld [vmem:[#allocation5 + $0x10] sm:$0xff]
    %v73 = vld [vmem:[#allocation5 + $0x18] sm:$0xff]
    %v74 = vld [vmem:[#allocation5 + $0x20] sm:$0xff]
    %v75 = vld [vmem:[#allocation5 + $0x28] sm:$0xff]
    %v76 = vld [vmem:[#allocation5 + $0x30] sm:$0xff]
    %v77 = vld [vmem:[#allocation5 + $0x38] sm:$0xff]
    %v78 = vld [vmem:[#allocation5 + $0x40] sm:$0xff]
    %v79 = vld [vmem:[#allocation5 + $0x48] sm:$0xff]
    %v80 = vld [vmem:[#allocation5 + $0x50] sm:$0xff]
    %v81 = vld [vmem:[#allocation5 + $0x58] sm:$0xff]
    %v82 = vld [vmem:[#allocation5 + $0x60] sm:$0xff]
    %v83 = vld [vmem:[#allocation5 + $0x68] sm:$0xff]
    %v84 = vld [vmem:[#allocation5 + $0x70] sm:$0xff]
    %v85 = vld [vmem:[#allocation5 + $0x78] sm:$0xff]
    %v86 = vld [vmem:[%s2] sm:$0x1]
    %v88 = vperm.slane %v86, 0
    %90 = vmatpush.msra.mxu0 %v85
    %91 = vmatpush.msra.mxu0 %v84
    %92 = vmatpush.msra.mxu0 %v83
    %93 = vmatpush.msra.mxu0 %v82
    %94 = vmatpush.msra.mxu0 %v81
    %95 = vmatpush.msra.mxu0 %v80
    %96 = vmatpush.msra.mxu0 %v79
    %97 = vmatpush.msra.mxu0 %v78
    %98 = vmatpush.msra.mxu0 %v77
    %99 = vmatpush.msra.mxu0 %v76
    %100 = vmatpush.msra.mxu0 %v75
    %101 = vmatpush.msra.mxu0 %v74
    %102 = vmatpush.msra.mxu0 %v73
    %103 = vmatpush.msra.mxu0 %v72
    %104 = vmatpush.msra.mxu0 %v71
    %105 = vmatpush.msra.mxu0 %v70
    %106 = vmatmul.f32.gmra.mxu0 %v68
    %v107 = vpop.f32.mrf.mxu0
    %v108 = vadd.f32 %v88, %v107
    %109 = vmatmul.f32.gmra.mxu0 %v69
    %v110 = vpop.f32.mrf.mxu0
    %v111 = vadd.f32 %v88, %v110
    %112 = vdwg.mxu0
    %v113 = vmax.f32 %v108, 0.0
    %v114 = vmax.f32 %v111, 0.0
    %v115 = vld [vmem:[#allocation7] sm:$0xff]
    %v116 = vld [vmem:[#allocation7 + $0x8] sm:$0xff]
    %v117 = vld [vmem:[#allocation7 + $0x10] sm:$0xff]
    %v118 = vld [vmem:[#allocation7 + $0x18] sm:$0xff]
    %v119 = vld [vmem:[#allocation7 + $0x20] sm:$0xff]
    %v120 = vld [vmem:[#allocation7 + $0x28] sm:$0xff]
    %v121 = vld [vmem:[#allocation7 + $0x30] sm:$0xff]
    %v122 = vld [vmem:[#allocation7 + $0x38] sm:$0xff]
    %v123 = vld [vmem:[#allocation7 + $0x40] sm:$0xff]
    %v124 = vld [vmem:[#allocation7 + $0x48] sm:$0xff]
    %v125 = vld [vmem:[#allocation7 + $0x50] sm:$0xff]
    %v126 = vld [vmem:[#allocation7 + $0x58] sm:$0xff]
    %v127 = vld [vmem:[#allocation7 + $0x60] sm:$0xff]
    %v128 = vld [vmem:[#allocation7 + $0x68] sm:$0xff]
    %v129 = vld [vmem:[#allocation7 + $0x70] sm:$0xff]
    %v130 = vld [vmem:[#allocation7 + $0x78] sm:$0xff]
    %v131 = vld [vmem:[%s4] sm:$0x1]
    %v133 = vperm.slane %v131, 0
    %135 = vmatpush.msra.mxu0 %v130
    %136 = vmatpush.msra.mxu0 %v129
    %137 = vmatpush.msra.mxu0 %v128
    %138 = vmatpush.msra.mxu0 %v127
    %139 = vmatpush.msra.mxu0 %v126
    %140 = vmatpush.msra.mxu0 %v125
    %141 = vmatpush.msra.mxu0 %v124
    %142 = vmatpush.msra.mxu0 %v123
    %143 = vmatpush.msra.mxu0 %v122
    %144 = vmatpush.msra.mxu0 %v121
    %145 = vmatpush.msra.mxu0 %v120
    %146 = vmatpush.msra.mxu0 %v119
    %147 = vmatpush.msra.mxu0 %v118
    %148 = vmatpush.msra.mxu0 %v117
    %149 = vmatpush.msra.mxu0 %v116
    %150 = vmatpush.msra.mxu0 %v115
    %151 = vmatmul.f32.gmra.mxu0 %v113
    %v152 = vpop.f32.mrf.mxu0
    %v153 = vadd.f32 %v133, %v152
    %154 = vmatmul.f32.gmra.mxu0 %v114
    %v155 = vpop.f32.mrf.mxu0
    %v156 = vadd.f32 %v133, %v155
    %157 = vdwg.mxu0
    %158 = vst [vmem:[#allocation8] sm:$0xff] %v153
    %159 = vst [vmem:[#allocation8 + $0x8] sm:$0xff] %v156
    // Predicated region
    $region34: #{tpu_custom_call.1} parent=1 // pred_check
      _
    $region35: #{tpu_custom_call.1} parent=1 // pred_check_branch
      %161 = sbr.rel (0) target = $region37
    $region36: #{tpu_custom_call.1} parent=1 // pred_region
      %163 = vsyncadd [#allocation4], 0
      %s164 = sshll.u32 [#allocation8], 4
      %s165 = int_to_ptr.vmem [resolvable:$true] %s164
      %s166 = sshll.u32 %s5, 4
      %s167 = int_to_ptr.hbm [resolvable:$true] %s166
      %172 = dma.vmem_to_hbm [thread:$0]  %s165, 256, %s167, [#allocation4], 128, 128, 8
    $region37: #{tpu_custom_call.1} parent=1 // pred_fallthru
      _
    // Predicated region
    $region38: #{tpu_custom_call.1} parent=1 // pred_check
      _
    $region39: #{tpu_custom_call.1} parent=1 // pred_check_branch
      %174 = sbr.rel (0) target = $region41
    $region40: #{tpu_custom_call.1} parent=1 // pred_region
      %176 = dma.done [#allocation4], 256
    $region41: #{tpu_custom_call.1} parent=1 // pred_fallthru
      _
    %177 = vsyncpa [#allocation3], 1
    %178 = vsyncpa [#allocation6], 1
    %179 = vsyncpa [#allocation4], 1

</llo_original>
